<compile_context>
chip_gen: v7x
topology: tpu7x:2x2x1
jax: 0.10.0
libtpu: 0.0.40
codegen_flags: <defaults>
</compile_context>

<pallas_src>
from functools import partial

import jax
import jax.numpy as jnp
from jax.experimental import pallas as pl
from jax.experimental.pallas import tpu as pltpu


# MXU operand dtype.  bf16 runs at full MXU rate on v5e/v6e/v7x (v5e has no
# fast f32 matmul path) and halves operand vreg/VMEM footprint; accumulation
# stays f32 via preferred_element_type.  The bf16 operands are the *normalized*
# activations (unit-ish scale), so quantization error stays ~1e-3 relative;
# the final check uses a 2e-2 tolerance accordingly.
MATMUL_DTYPE = jnp.bfloat16


def bn_stats_kernel(x_ref, gamma_ref, beta_ref, scale_ref, shift_ref, *, eps):
    """Per-channel BatchNorm(train) scale/shift from batch statistics.

    x_ref     : (N, C, H*W) raw input (channels on sublanes, pixels on lanes)
    gamma_ref : (C, 1)
    beta_ref  : (C, 1)
    scale_ref : (C, 1) out: gamma * rsqrt(var + eps)
    shift_ref : (C, 1) out: beta - mean * scale
    """
    N, C, HW = x_ref.shape
    xf = x_ref[...].astype(jnp.float32)
    inv_cnt = 1.0 / float(N * HW)
    # Pixels live on the lane axis -> per-channel sums are dense cross-lane
    # reductions (XLU); the batch axis reduces with plain VPU adds.
    mean = jnp.sum(jnp.sum(xf, axis=0), axis=1, keepdims=True) * inv_cnt   # (C, 1)
    cent = xf - mean[None]                                                 # (N, C, HW)
    # Two-pass (centered) variance: avoids E[x^2] - E[x]^2 cancellation.
    var = jnp.sum(jnp.sum(cent * cent, axis=0), axis=1, keepdims=True) * inv_cnt
    inv_std = jax.lax.rsqrt(var + eps)
    scale = gamma_ref[...] * inv_std
    scale_ref[...] = scale
    shift_ref[...] = beta_ref[...] - mean * scale


def conv_bn_kernel(x_ref, scale_ref, shift_ref, w_ref, b_ref, o_ref, *, KH, KW, W):
    """Normalize one image and convolve it (stride 1, VALID) in one MXU matmul.

    x_ref     : (C, H*W)      one image, pixels on lanes
    scale_ref : (C, 1)        BN scale (from bn_stats_kernel), f32
    shift_ref : (C, 1)        BN shift, f32
    w_ref     : (O, KH*KW*C)  conv weight, c fastest within each tap (bf16)
    b_ref     : (O, 1)        conv bias, f32
    o_ref     : (O, H*W)      lane-dense output slab; columns with ho >= Ho or
                              wo >= Wo are don't-care and cropped by the wrapper
    """
    C, HW = x_ref.shape
    # Normalize once; the normalized image only lives in vregs (never in HBM).
    xn = x_ref[...].astype(jnp.float32) * scale_ref[...] + shift_ref[...]   # (C, HW)
    # Duplicate along lanes so every tap window (offset kh*W + kw) is a single
    # in-bounds contiguous lane slice; wrapped columns are don't-care.
    xcat = jnp.concatenate([xn, xn], axis=1)                                # (C, 2*HW)
    # im2col as a value: 9 lane-shifted (C, HW) slabs stacked on sublanes.
    # No scratch round-trip, no narrow masked stores.
    slabs = [xcat[:, kh * W + kw: kh * W + kw + HW]
             for kh in range(KH) for kw in range(KW)]
    patch = jnp.concatenate(slabs, axis=0).astype(w_ref.dtype)              # (K, HW)
    # (O, K) @ (K, HW): output pixels on lanes -> full-width MXU columns and
    # unmasked, lane-dense stores of the (O, HW) result.
    acc = jnp.dot(w_ref[...], patch, preferred_element_type=jnp.float32)    # (O, HW)
    o_ref[...] = (acc + b_ref[...]).astype(o_ref.dtype)


def build_conv_bn_forward(conv_w, conv_b, gamma, beta, eps=1e-5):
    """Returns a jitted forward(x_nchw) closed over fixed conv/BN parameters."""
    O, C, KH, KW = conv_w.shape
    K = KH * KW * C

    # One-time parameter relayout (outside the per-call hot path):
    #   OIHW -> (O, KH*KW*C) with c fastest within each tap, cast to the MXU
    #   operand dtype once here.
    w_l = jnp.transpose(conv_w, (0, 2, 3, 1)).reshape(O, K).astype(MATMUL_DTYPE)
    b2 = conv_b.reshape(O, 1).astype(jnp.float32)
    g2 = gamma.reshape(C, 1).astype(jnp.float32)
    bt2 = beta.reshape(C, 1).astype(jnp.float32)

    @jax.jit
    def forward(x_nchw):
        N, _, H, W = x_nchw.shape
        Ho, Wo = H - KH + 1, W - KW + 1
        HW = H * W
        # Free (contiguous) view; channels -> sublanes, pixels -> lanes.
        x2 = x_nchw.reshape(N, C, HW)

        # --- pass 1: tiny BN-stats kernel (hoisted so conv tiles are independent)
        scale, shift = pl.pallas_call(
            partial(bn_stats_kernel, eps=eps),
            out_shape=(jax.ShapeDtypeStruct((C, 1), jnp.float32),
                       jax.ShapeDtypeStruct((C, 1), jnp.float32)),
            in_specs=[pl.BlockSpec(memory_space=pltpu.MemorySpace.VMEM)] * 3,
            out_specs=(pl.BlockSpec(memory_space=pltpu.MemorySpace.VMEM),
                       pl.BlockSpec(memory_space=pltpu.MemorySpace.VMEM)),
        )(x2, g2, bt2)

        # --- pass 2: fused normalize + conv, gridded over images (megacore).
        out_slab = pl.pallas_call(
            partial(conv_bn_kernel, KH=KH, KW=KW, W=W),
            out_shape=jax.ShapeDtypeStruct((N, O, HW), x_nchw.dtype),
            grid=(N,),
            in_specs=[
                pl.BlockSpec((None, C, HW), lambda n: (n, 0, 0)),
                pl.BlockSpec((C, 1), lambda n: (0, 0)),
                pl.BlockSpec((C, 1), lambda n: (0, 0)),
                pl.BlockSpec((O, K), lambda n: (0, 0)),
                pl.BlockSpec((O, 1), lambda n: (0, 0)),
            ],
            out_specs=pl.BlockSpec((None, O, HW), lambda n: (n, 0, 0)),
            compiler_params=pltpu.CompilerParams(
                dimension_semantics=("parallel",)),
        )(x2, scale, shift, w_l, b2)

        # (N, O, H*W) -> (N, O, H, W), then crop to the VALID window.  This is
        # already NCHW: no transpose anywhere in the wrapper.
        return out_slab.reshape(N, O, H, W)[:, :, :Ho, :Wo]

    return forward


def reference_forward(x, gamma, beta, w, b, eps=1e-5):
    # Pure-JAX reference for correctness checking (NCHW throughout, f32).
    mean = jnp.mean(x, axis=(0, 2, 3), keepdims=True)
    var = jnp.mean((x - mean) ** 2, axis=(0, 2, 3), keepdims=True)
    xn = (x - mean) / jnp.sqrt(var + eps)
    xn = xn * gamma.reshape(1, -1, 1, 1) + beta.reshape(1, -1, 1, 1)
    y = jax.lax.conv_general_dilated(
        xn, w, window_strides=(1, 1), padding="VALID",
        dimension_numbers=("NCHW", "OIHW", "NCHW"))
    return y + b.reshape(1, -1, 1, 1)


if __name__ == "__main__":
    key = jax.random.PRNGKey(0)
    k_x, k_w, k_b = jax.random.split(key, 3)

    N, C_in, H, W = 2, 4, 16, 16
    C_out, KH, KW = 8, 3, 3

    x = jax.random.normal(k_x, (N, C_in, H, W), dtype=jnp.float32)

    # Conv2d init (deterministic, kaiming-uniform-like bounds).
    fan_in = C_in * KH * KW
    bound = float(1.0 / (fan_in ** 0.5))
    conv_w = jax.random.uniform(k_w, (C_out, C_in, KH, KW),
                                minval=-bound, maxval=bound, dtype=jnp.float32)
    conv_b = jax.random.uniform(k_b, (C_out,),
                                minval=-bound, maxval=bound, dtype=jnp.float32)

    # BatchNorm2d default affine init.
    gamma = jnp.ones((C_in,), jnp.float32)
    beta = jnp.zeros((C_in,), jnp.float32)

    forward = build_conv_bn_forward(conv_w, conv_b, gamma, beta)
    out = jax.block_until_ready(forward(x))

    ref = reference_forward(x, gamma, beta, conv_w, conv_b)
    assert out.shape == (N, C_out, H - KH + 1, W - KW + 1), out.shape
    # bf16 MXU operands on normalized activations -> ~1e-2-scale tolerance.
    assert jnp.allclose(out, ref, atol=2e-2, rtol=2e-2), (
        float(jnp.max(jnp.abs(out - ref))))

    print("KERNEL_OK")
</pallas_src>

<mosaic_0001>
module attributes {stable_mosaic.version = 11 : i64} {
  func.func @conv_bn_kernel(%arg0: i32, %arg1: memref<1x4x256xf32, #tpu.memory_space<vmem>>, %arg2: memref<4x1xf32, #tpu.memory_space<vmem>>, %arg3: memref<4x1xf32, #tpu.memory_space<vmem>>, %arg4: memref<8x36xbf16, #tpu.memory_space<vmem>>, %arg5: memref<8x1xf32, #tpu.memory_space<vmem>>, %arg6: memref<1x8x256xf32, #tpu.memory_space<vmem>>) attributes {dimension_semantics = [#tpu.dimension_semantics<parallel>], iteration_bounds = array<i64: 2>, scalar_prefetch = 0 : i64, scratch_operands = 0 : i64, tpu.core_type = #tpu.core_type<tc>, window_params = [{transform_indices = @transform_0, window_bounds = array<i64: 1, 4, 256>}, {pipeline_mode = #tpu.pipeline_mode<synchronous>, transform_indices = @transform_1, window_bounds = array<i64: 4, 1>}, {pipeline_mode = #tpu.pipeline_mode<synchronous>, transform_indices = @transform_2, window_bounds = array<i64: 4, 1>}, {pipeline_mode = #tpu.pipeline_mode<synchronous>, transform_indices = @transform_3, window_bounds = array<i64: 8, 36>}, {pipeline_mode = #tpu.pipeline_mode<synchronous>, transform_indices = @transform_4, window_bounds = array<i64: 8, 1>}, {transform_indices = @transform_5, window_bounds = array<i64: 1, 8, 256>}]} {
    %c0 = arith.constant 0 : index
    %c0_0 = arith.constant 0 : index
    %c0_1 = arith.constant 0 : index
    %0 = vector.load %arg1[%c0, %c0_0, %c0_1] : memref<1x4x256xf32, #tpu.memory_space<vmem>>, vector<1x4x256xf32>
    %1 = vector.shape_cast %0 : vector<1x4x256xf32> to vector<4x256xf32>
    %c0_2 = arith.constant 0 : index
    %c0_3 = arith.constant 0 : index
    %2 = vector.load %arg2[%c0_2, %c0_3] : memref<4x1xf32, #tpu.memory_space<vmem>>, vector<4x1xf32>
    %3 = vector.broadcast %2 : vector<4x1xf32> to vector<4x256xf32>
    %4 = arith.mulf %1, %3 : vector<4x256xf32>
    %c0_4 = arith.constant 0 : index
    %c0_5 = arith.constant 0 : index
    %5 = vector.load %arg3[%c0_4, %c0_5] : memref<4x1xf32, #tpu.memory_space<vmem>>, vector<4x1xf32>
    %6 = vector.broadcast %5 : vector<4x1xf32> to vector<4x256xf32>
    %7 = arith.addf %4, %6 : vector<4x256xf32>
    %8 = tpu.concatenate %7, %7 in 1 : vector<4x256xf32>, vector<4x256xf32> -> vector<4x512xf32>
    %9 = vector.extract_strided_slice %8 {offsets = [0, 0], sizes = [4, 256], strides = [1, 1]} : vector<4x512xf32> to vector<4x256xf32>
    %10 = vector.extract_strided_slice %8 {offsets = [0, 1], sizes = [4, 256], strides = [1, 1]} : vector<4x512xf32> to vector<4x256xf32>
    %11 = vector.extract_strided_slice %8 {offsets = [0, 2], sizes = [4, 256], strides = [1, 1]} : vector<4x512xf32> to vector<4x256xf32>
    %12 = vector.extract_strided_slice %8 {offsets = [0, 16], sizes = [4, 256], strides = [1, 1]} : vector<4x512xf32> to vector<4x256xf32>
    %13 = vector.extract_strided_slice %8 {offsets = [0, 17], sizes = [4, 256], strides = [1, 1]} : vector<4x512xf32> to vector<4x256xf32>
    %14 = vector.extract_strided_slice %8 {offsets = [0, 18], sizes = [4, 256], strides = [1, 1]} : vector<4x512xf32> to vector<4x256xf32>
    %15 = vector.extract_strided_slice %8 {offsets = [0, 32], sizes = [4, 256], strides = [1, 1]} : vector<4x512xf32> to vector<4x256xf32>
    %16 = vector.extract_strided_slice %8 {offsets = [0, 33], sizes = [4, 256], strides = [1, 1]} : vector<4x512xf32> to vector<4x256xf32>
    %17 = vector.extract_strided_slice %8 {offsets = [0, 34], sizes = [4, 256], strides = [1, 1]} : vector<4x512xf32> to vector<4x256xf32>
    %18 = tpu.concatenate %9, %10, %11, %12, %13, %14, %15, %16, %17 in 0 : vector<4x256xf32>, vector<4x256xf32>, vector<4x256xf32>, vector<4x256xf32>, vector<4x256xf32>, vector<4x256xf32>, vector<4x256xf32>, vector<4x256xf32>, vector<4x256xf32> -> vector<36x256xf32>
    %19 = arith.truncf %18 : vector<36x256xf32> to vector<36x256xbf16>
    %c0_6 = arith.constant 0 : index
    %c0_7 = arith.constant 0 : index
    %20 = vector.load %arg4[%c0_6, %c0_7] : memref<8x36xbf16, #tpu.memory_space<vmem>>, vector<8x36xbf16>
    %cst = arith.constant dense<0.000000e+00> : vector<8x256xf32>
    %21 = tpu.matmul %20, %19, %cst {dimension_numbers = #tpu.dot_dimension_numbers<[1], [0], [0], [1], [0, 0, 1, 1], [], []>} : vector<8x36xbf16>, vector<36x256xbf16>, vector<8x256xf32> -> vector<8x256xf32>
    %c0_8 = arith.constant 0 : index
    %c0_9 = arith.constant 0 : index
    %22 = vector.load %arg5[%c0_8, %c0_9] : memref<8x1xf32, #tpu.memory_space<vmem>>, vector<8x1xf32>
    %23 = vector.broadcast %22 : vector<8x1xf32> to vector<8x256xf32>
    %24 = arith.addf %21, %23 : vector<8x256xf32>
    %c0_10 = arith.constant 0 : index
    %c0_11 = arith.constant 0 : index
    %c0_12 = arith.constant 0 : index
    %25 = vector.load %arg6[%c0_10, %c0_11, %c0_12] : memref<1x8x256xf32, #tpu.memory_space<vmem>>, vector<1x8x256xf32>
    %26 = vector.shape_cast %25 : vector<1x8x256xf32> to vector<8x256xf32>
    %27 = vector.shape_cast %24 : vector<8x256xf32> to vector<1x8x256xf32>
    tpu.vector_store %arg6[%c0_10, %c0_11, %c0_12], %27 {strides = array<i32>} : memref<1x8x256xf32, #tpu.memory_space<vmem>>, vector<1x8x256xf32>,
    return
  }
  func.func @transform_0(%arg0: i32) -> (i32, i32, i32) {
    %c0_i32 = arith.constant 0 : i32
    %c0_i32_0 = arith.constant 0 : i32
    %c0_i32_1 = arith.constant 0 : i32
    return %arg0, %c0_i32, %c0_i32_0 : i32, i32, i32
  }
  func.func @transform_1(%arg0: i32) -> (i32, i32) {
    %c0_i32 = arith.constant 0 : i32
    %c0_i32_0 = arith.constant 0 : i32
    %c0_i32_1 = arith.constant 0 : i32
    return %c0_i32, %c0_i32_0 : i32, i32
  }
  func.func @transform_2(%arg0: i32) -> (i32, i32) {
    %c0_i32 = arith.constant 0 : i32
    %c0_i32_0 = arith.constant 0 : i32
    %c0_i32_1 = arith.constant 0 : i32
    return %c0_i32, %c0_i32_0 : i32, i32
  }
  func.func @transform_3(%arg0: i32) -> (i32, i32) {
    %c0_i32 = arith.constant 0 : i32
    %c0_i32_0 = arith.constant 0 : i32
    %c0_i32_1 = arith.constant 0 : i32
    return %c0_i32, %c0_i32_0 : i32, i32
  }
  func.func @transform_4(%arg0: i32) -> (i32, i32) {
    %c0_i32 = arith.constant 0 : i32
    %c0_i32_0 = arith.constant 0 : i32
    %c0_i32_1 = arith.constant 0 : i32
    return %c0_i32, %c0_i32_0 : i32, i32
  }
  func.func @transform_5(%arg0: i32) -> (i32, i32, i32) {
    %c0_i32 = arith.constant 0 : i32
    %c0_i32_0 = arith.constant 0 : i32
    %c0_i32_1 = arith.constant 0 : i32
    return %arg0, %c0_i32, %c0_i32_0 : i32, i32, i32
  }
}

module attributes {stable_mosaic.version = 11 : i64} {
  func.func @bn_stats_kernel(%arg0: memref<2x4x256xf32, #tpu.memory_space<vmem>>, %arg1: memref<4x1xf32, #tpu.memory_space<vmem>>, %arg2: memref<4x1xf32, #tpu.memory_space<vmem>>, %arg3: memref<4x1xf32, #tpu.memory_space<vmem>>, %arg4: memref<4x1xf32, #tpu.memory_space<vmem>>) attributes {dimension_semantics = [], scalar_prefetch = 0 : i64, scratch_operands = 0 : i64, tpu.core_type = #tpu.core_type<tc>} {
    %c0 = arith.constant 0 : index
    %c0_0 = arith.constant 0 : index
    %c0_1 = arith.constant 0 : index
    %0 = vector.load %arg0[%c0, %c0_0, %c0_1] : memref<2x4x256xf32, #tpu.memory_space<vmem>>, vector<2x4x256xf32>
    %cst = arith.constant dense<0.000000e+00> : vector<4x256xf32>
    %1 = vector.multi_reduction <add>, %0, %cst [0] : vector<2x4x256xf32> to vector<4x256xf32>
    %cst_2 = arith.constant dense<0.000000e+00> : vector<4xf32>
    %2 = vector.multi_reduction <add>, %1, %cst_2 [1] : vector<4x256xf32> to vector<4xf32>
    %3 = vector.shape_cast %2 : vector<4xf32> to vector<4x1xf32>
    %cst_3 = arith.constant 0.001953125 : f32
    %4 = vector.broadcast %cst_3 : f32 to vector<4x1xf32>
    %5 = arith.mulf %3, %4 : vector<4x1xf32>
    %6 = vector.shape_cast %5 : vector<4x1xf32> to vector<1x4x1xf32>
    %7 = vector.broadcast %6 : vector<1x4x1xf32> to vector<2x4x256xf32>
    %8 = arith.subf %0, %7 : vector<2x4x256xf32>
    %9 = arith.mulf %8, %8 : vector<2x4x256xf32>
    %cst_4 = arith.constant dense<0.000000e+00> : vector<4x256xf32>
    %10 = vector.multi_reduction <add>, %9, %cst_4 [0] : vector<2x4x256xf32> to vector<4x256xf32>
    %cst_5 = arith.constant dense<0.000000e+00> : vector<4xf32>
    %11 = vector.multi_reduction <add>, %10, %cst_5 [1] : vector<4x256xf32> to vector<4xf32>
    %12 = vector.shape_cast %11 : vector<4xf32> to vector<4x1xf32>
    %cst_6 = arith.constant 0.001953125 : f32
    %13 = vector.broadcast %cst_6 : f32 to vector<4x1xf32>
    %14 = arith.mulf %12, %13 : vector<4x1xf32>
    %cst_7 = arith.constant 9.99999974E-6 : f32
    %15 = vector.broadcast %cst_7 : f32 to vector<4x1xf32>
    %16 = arith.addf %14, %15 : vector<4x1xf32>
    %17 = math.rsqrt %16 : vector<4x1xf32>
    %c0_8 = arith.constant 0 : index
    %c0_9 = arith.constant 0 : index
    %18 = vector.load %arg1[%c0_8, %c0_9] : memref<4x1xf32, #tpu.memory_space<vmem>>, vector<4x1xf32>
    %19 = arith.mulf %18, %17 : vector<4x1xf32>
    %c0_10 = arith.constant 0 : index
    %c0_11 = arith.constant 0 : index
    %20 = vector.load %arg3[%c0_10, %c0_11] : memref<4x1xf32, #tpu.memory_space<vmem>>, vector<4x1xf32>
    tpu.vector_store %arg3[%c0_10, %c0_11], %19 {strides = array<i32>} : memref<4x1xf32, #tpu.memory_space<vmem>>, vector<4x1xf32>,
    %c0_12 = arith.constant 0 : index
    %c0_13 = arith.constant 0 : index
    %21 = vector.load %arg2[%c0_12, %c0_13] : memref<4x1xf32, #tpu.memory_space<vmem>>, vector<4x1xf32>
    %22 = arith.mulf %5, %19 : vector<4x1xf32>
    %23 = arith.subf %21, %22 : vector<4x1xf32>
    %c0_14 = arith.constant 0 : index
    %c0_15 = arith.constant 0 : index
    %24 = vector.load %arg4[%c0_14, %c0_15] : memref<4x1xf32, #tpu.memory_space<vmem>>, vector<4x1xf32>
    tpu.vector_store %arg4[%c0_14, %c0_15], %23 {strides = array<i32>} : memref<4x1xf32, #tpu.memory_space<vmem>>, vector<4x1xf32>,
    return
  }
}

</mosaic_0001>

<llo_original>
// kernel: forward.2
$region0: #{forward.2}
  #allocation0 [shape = 'u32[]', space=smem, size = 0x4, offset = 0x4, fixed_abs, tag = 'smem constant byte address 0x4 - core index']
  #allocation1 [shape = 'u32[144,128]{1,0:T(1,128)}', space=vmem, size = 0x12000, scoped, tag = 'internal scratch']
  %s0 = inlined_call_operand.vmem [shape: f32[2,4,256], index: 0, kind: input, shape index: {}]
  %s1 = inlined_call_operand.vmem [shape: f32[4,1], index: 1, kind: input, shape index: {}]
  %s2 = inlined_call_operand.vmem [shape: f32[4,1], index: 2, kind: input, shape index: {}]
  %s3 = inlined_call_operand.vmem [shape: f32[4,1], index: 3, kind: output, shape index: {0}]
  %s4 = inlined_call_operand.vmem [shape: f32[4,1], index: 4, kind: output, shape index: {1}]
  %5 = xla_tuple %s3, %s4
  %s6 = sld [smem:[#allocation0]]
  $region30: #{forward.2} parent=0
    _
  %s8 = ssub.s32 1, %s6
  %s9 = scalar_select 0, %s8, %s6
  // Predicated region
  $region2: #{forward.2} parent=0 // pred_check
    _
  $region3: #{forward.2} parent=0 // pred_check_branch
    %11 = sbr.rel (0) target = $region5
  $region4: #{forward.2} parent=0 // pred_region
    _
  $region5: #{forward.2} parent=0 // pred_fallthru
    _
  // Predicated region
  $region6: #{forward.2} parent=0 // pred_check
    _
  $region7: #{forward.2} parent=0 // pred_check_branch
    %13 = sbr.rel (0) target = $region9
  $region8: #{forward.2} parent=0 // pred_region
    _
  $region9: #{forward.2} parent=0 // pred_fallthru
    _
  // Predicated region
  $region10: #{forward.2} parent=0 // pred_check
    _
  $region11: #{forward.2} parent=0 // pred_check_branch
    %15 = sbr.rel (0) target = $region13
  $region12: #{forward.2} parent=0 // pred_region
    _
  $region13: #{forward.2} parent=0 // pred_fallthru
    _
  %v16 = vld [vmem:[%s0] sm:$0xff]
  %v17 = vld [vmem:[%s0 + $0x8] sm:$0xff]
  %v20 = vcombine.high %v16, %v16
  %v21 = vcombine.high %v17, %v17
  %vm24 = vcmask 1043456
  %v25 = vsel %vm24, %v16, 0.0
  %v26 = vsel %vm24, %v17, 0.0
  %v27 = vadd.f32 %v25, %v26
  %v28 = vsel %vm24, %v20, 0.0
  %v29 = vsel %vm24, %v21, 0.0
  %v30 = vadd.f32 %v28, %v29
  %v31 = vsel %vm24, %v27, 0.0
  %v32 = vsel %vm24, %v30, 0.0
  %v33 = vadd.f32 %v31, %v32
  %34 = vadd.xlane.f32.xlu0 %v33
  %v35 = vpop.xlane.xlu0 %34
  %v36 = vmul.f32 %v35, 0.001953125
  %v39 = vunpack.c.l.s4 839922192
  %v40 = vunpack.c.0.s8 %v39
  %v41 = vlaneseq
  %v42 = vshrl.u32 %v41, 7
  %v43 = vsub.s32 %v40, %v42
  %v44 = vrot.slane %v36, %v43
  %v46 = vsub.f32 %v16, %v44
  %v47 = vsub.f32 %v17, %v44
  %v48 = vmul.f32 %v46, %v46
  %v49 = vmul.f32 %v47, %v47
  %v52 = vcombine.high %v48, %v48
  %v53 = vcombine.high %v49, %v49
  %v56 = vsel %vm24, %v48, 0.0
  %v57 = vsel %vm24, %v49, 0.0
  %v58 = vadd.f32 %v56, %v57
  %v59 = vsel %vm24, %v52, 0.0
  %v60 = vsel %vm24, %v53, 0.0
  %v61 = vadd.f32 %v59, %v60
  %v62 = vsel %vm24, %v58, 0.0
  %v63 = vsel %vm24, %v61, 0.0
  %v64 = vadd.f32 %v62, %v63
  %65 = vadd.xlane.f32.xlu0 %v64
  %v66 = vpop.xlane.xlu0 %65
  %v67 = vmul.f32 %v66, 0.001953125
  %v68 = vadd.f32 %v67, 1e-05
  %v69 = vrsqrt.pop %v68
  %v70 = vld [vmem:[%s1] sm:$0xf]
  %v71 = vmul.f32 %v70, %v69
  %vm72 = vcmask 3072
  %73 = vst.msk [vmem:[%s3] sm:$0xf] %vm72, %v71
  %v74 = vld [vmem:[%s2] sm:$0xf]
  %v75 = vmul.f32 %v36, %v71
  %v76 = vsub.f32 %v74, %v75
  %77 = vst.msk [vmem:[%s4] sm:$0xf] %vm72, %v76
  // Predicated region
  $region14: #{forward.2} parent=0 // pred_check
    _
  $region15: #{forward.2} parent=0 // pred_check_branch
    %79 = sbr.rel (0) target = $region17
  $region16: #{forward.2} parent=0 // pred_region
    _
  $region17: #{forward.2} parent=0 // pred_fallthru
    _
  // Predicated region
  $region18: #{forward.2} parent=0 // pred_check
    _
  $region19: #{forward.2} parent=0 // pred_check_branch
    %81 = sbr.rel (0) target = $region21
  $region20: #{forward.2} parent=0 // pred_region
    _
  $region21: #{forward.2} parent=0 // pred_fallthru
    _
  // Predicated region
  $region22: #{forward.2} parent=0 // pred_check
    _
  $region23: #{forward.2} parent=0 // pred_check_branch
    %83 = sbr.rel (0) target = $region25
  $region24: #{forward.2} parent=0 // pred_region
    _
  $region25: #{forward.2} parent=0 // pred_fallthru
    _
  // Predicated region
  $region26: #{forward.2} parent=0 // pred_check
    _
  $region27: #{forward.2} parent=0 // pred_check_branch
    %85 = sbr.rel (0) target = $region29
  $region28: #{forward.2} parent=0 // pred_region
    _
  $region29: #{forward.2} parent=0 // pred_fallthru
    _

// kernel: forward.3
$region0: #{forward.3}
  #allocation0 [shape = 'u32[]', space=smem, size = 0x4, offset = 0x4, fixed_abs, tag = 'smem constant byte address 0x4 - core index']
  #allocation1 [shape = 'u32[144,128]{1,0:T(1,128)}', space=vmem, size = 0x12000, scoped, tag = 'internal scratch']
  %s0 = inlined_call_operand.vmem [shape: f32[2,4,256], index: 0, kind: input, shape index: {}]
  %s1 = inlined_call_operand.vmem [shape: f32[4,1], index: 1, kind: input, shape index: {}]
  %s2 = inlined_call_operand.vmem [shape: f32[4,1], index: 2, kind: input, shape index: {}]
  %s3 = inlined_call_operand.vmem [shape: bf16[8,36], index: 3, kind: input, shape index: {}]
  %s4 = inlined_call_operand.vmem [shape: f32[8,1], index: 4, kind: input, shape index: {}]
  %s5 = inlined_call_operand.vmem [shape: f32[2,8,256], index: 5, kind: output, shape index: {}]
  %s6 = sld [smem:[#allocation0]]
  $region53: #{forward.3} parent=0
    _
  %s8 = ssub.s32 1, %s6
  %s9 = scalar_select 0, %s8, %s6
  loop: start=0, step=1, limit=4
  $region2: #{forward.3} parent=0 // loop_pre_header
    _
  $region3: #{forward.3} parent=0 // loop_header
    %s11 = sphi 0, %s15
    %p12 = scmp.ge.s32.totalorder %s11, 4
    %s21 = sphi 0, %s23
    %s24 = sphi 0, %s21
    %s25 = sphi 0, %s24
    %s41 = sphi 0, %s25
    %s45 = sphi 0, %s45
    %s47 = sphi 0, %s45
    %s48 = sphi 0, %s47
    %s62 = sphi 0, %s48
    %s66 = sphi 0, %s66
    %s68 = sphi 0, %s66
    %s69 = sphi 0, %s68
    %s83 = sphi 0, %s69
    %s87 = sphi 0, %s87
    %s89 = sphi 0, %s87
    %s90 = sphi 0, %s89
    %s104 = sphi 0, %s90
    %s108 = sphi 0, %s108
    %s110 = sphi 0, %s108
    %s111 = sphi 0, %s110
    %s125 = sphi 0, %s111
    %s131 = sphi 0, %s133
    %s134 = sphi 0, %s131
    %s135 = sphi 0, %s134
    %s151 = sphi 0, %s135
  $region4: #{forward.3} parent=0 // loop_header_branch
    %14 = sbr.rel (%p12) target = $region8
  $region5: #{forward.3} parent=0 // loop_body
    %s16 = ssub.s32 %s11, 1
    %s17 = ssub.s32 %s11, 2
    %s18 = sadd.s32 %s11, 1
    %s19 = ssub.s32 %s11, %s18
    %p20 = scmp.eq.s32.totalorder %s19, 0
    %s22 = sadd.s32 %s21, 1
    %s23 = scalar_select %p20, %s21, %s22
    %p26 = pneg %p20
    %p27 = scmp.eq.s32.totalorder %s11, 1
    %p28 = por %p26, %p27
    %p29 = scmp.ne.s32.totalorder %s21, %s24
    %p30 = scmp.eq.s32.totalorder %s11, 0
    %p31 = por %p29, %p30
    %p32 = scmp.ne.s32.totalorder %s21, %s24
    %p33 = scmp.eq.s32.totalorder %s16, 1
    %p34 = por %p32, %p33
    %p35 = scmp.ne.s32.totalorder %s24, %s25
    %p36 = scmp.eq.s32.totalorder %s16, 0
    %p37 = por %p35, %p36
    %p38 = scmp.ne.s32.totalorder %s24, %s25
    %p39 = scmp.eq.s32.totalorder %s17, 1
    %p40 = por %p38, %p39
    %p42 = scmp.ne.s32.totalorder %s25, %s41
    %p43 = scmp.eq.s32.totalorder %s17, 0
    %p44 = por %p42, %p43
    %s46 = sadd.s32 %s45, 1
    %p49 = scmp.eq.s32.totalorder %s11, 1
    %p50 = scmp.ne.s32.totalorder %s45, %s47
    %p51 = scmp.eq.s32.totalorder %s11, 0
    %p52 = por %p50, %p51
    %p53 = scmp.ne.s32.totalorder %s45, %s47
    %p54 = scmp.eq.s32.totalorder %s16, 1
    %p55 = por %p53, %p54
    %p56 = scmp.ne.s32.totalorder %s47, %s48
    %p57 = scmp.eq.s32.totalorder %s16, 0
    %p58 = por %p56, %p57
    %p59 = scmp.ne.s32.totalorder %s47, %s48
    %p60 = scmp.eq.s32.totalorder %s17, 1
    %p61 = por %p59, %p60
    %p63 = scmp.ne.s32.totalorder %s48, %s62
    %p64 = scmp.eq.s32.totalorder %s17, 0
    %p65 = por %p63, %p64
    %s67 = sadd.s32 %s66, 1
    %p70 = scmp.eq.s32.totalorder %s11, 1
    %p71 = scmp.ne.s32.totalorder %s66, %s68
    %p72 = scmp.eq.s32.totalorder %s11, 0
    %p73 = por %p71, %p72
    %p74 = scmp.ne.s32.totalorder %s66, %s68
    %p75 = scmp.eq.s32.totalorder %s16, 1
    %p76 = por %p74, %p75
    %p77 = scmp.ne.s32.totalorder %s68, %s69
    %p78 = scmp.eq.s32.totalorder %s16, 0
    %p79 = por %p77, %p78
    %p80 = scmp.ne.s32.totalorder %s68, %s69
    %p81 = scmp.eq.s32.totalorder %s17, 1
    %p82 = por %p80, %p81
    %p84 = scmp.ne.s32.totalorder %s69, %s83
    %p85 = scmp.eq.s32.totalorder %s17, 0
    %p86 = por %p84, %p85
    %s88 = sadd.s32 %s87, 1
    %p91 = scmp.eq.s32.totalorder %s11, 1
    %p92 = scmp.ne.s32.totalorder %s87, %s89
    %p93 = scmp.eq.s32.totalorder %s11, 0
    %p94 = por %p92, %p93
    %p95 = scmp.ne.s32.totalorder %s87, %s89
    %p96 = scmp.eq.s32.totalorder %s16, 1
    %p97 = por %p95, %p96
    %p98 = scmp.ne.s32.totalorder %s89, %s90
    %p99 = scmp.eq.s32.totalorder %s16, 0
    %p100 = por %p98, %p99
    %p101 = scmp.ne.s32.totalorder %s89, %s90
    %p102 = scmp.eq.s32.totalorder %s17, 1
    %p103 = por %p101, %p102
    %p105 = scmp.ne.s32.totalorder %s90, %s104
    %p106 = scmp.eq.s32.totalorder %s17, 0
    %p107 = por %p105, %p106
    %s109 = sadd.s32 %s108, 1
    %p112 = scmp.eq.s32.totalorder %s11, 1
    %p113 = scmp.ne.s32.totalorder %s108, %s110
    %p114 = scmp.eq.s32.totalorder %s11, 0
    %p115 = por %p113, %p114
    %p116 = scmp.ne.s32.totalorder %s108, %s110
    %p117 = scmp.eq.s32.totalorder %s16, 1
    %p118 = por %p116, %p117
    %p119 = scmp.ne.s32.totalorder %s110, %s111
    %p120 = scmp.eq.s32.totalorder %s16, 0
    %p121 = por %p119, %p120
    %p122 = scmp.ne.s32.totalorder %s110, %s111
    %p123 = scmp.eq.s32.totalorder %s17, 1
    %p124 = por %p122, %p123
    %p126 = scmp.ne.s32.totalorder %s111, %s125
    %p127 = scmp.eq.s32.totalorder %s17, 0
    %p128 = por %p126, %p127
    %s129 = ssub.s32 %s11, %s18
    %p130 = scmp.eq.s32.totalorder %s129, 0
    %s132 = sadd.s32 %s131, 1
    %s133 = scalar_select %p130, %s131, %s132
    %p136 = pneg %p130
    %p137 = scmp.eq.s32.totalorder %s11, 1
    %p138 = por %p136, %p137
    %p139 = scmp.ne.s32.totalorder %s131, %s134
    %p140 = scmp.eq.s32.totalorder %s11, 0
    %p141 = por %p139, %p140
    %p142 = scmp.ne.s32.totalorder %s131, %s134
    %p143 = scmp.eq.s32.totalorder %s16, 1
    %p144 = por %p142, %p143
    %p145 = scmp.ne.s32.totalorder %s134, %s135
    %p146 = scmp.eq.s32.totalorder %s16, 0
    %p147 = por %p145, %p146
    %p148 = scmp.ne.s32.totalorder %s134, %s135
    %p149 = scmp.eq.s32.totalorder %s17, 1
    %p150 = por %p148, %p149
    %p152 = scmp.ne.s32.totalorder %s135, %s151
    %p153 = scmp.eq.s32.totalorder %s17, 0
    %p154 = por %p152, %p153
    %p155 = scmp.le.s32.totalorder 1, %s11
    %p156 = scmp.lt.s32.totalorder %s11, 3
    %p157 = pnand %p155, %p156
    %p158 = pneg %p157
    // Predicated region
    $region9: #{forward.3} parent=5 // pred_check
      _
    $region10: #{forward.3} parent=5 // pred_check_branch
      %160 = sbr.rel (%p157) target = $region12
    $region11: #{forward.3} parent=5 // pred_region
      %s161 = ssub.s32 %s11, 1
      // Predicated region
      $region13: #{forward.3} parent=11 // pred_check
        %p162 = pneg %p58
      $region14: #{forward.3} parent=11 // pred_check_branch
        %164 = sbr.rel (%p162) target = $region16
      $region15: #{forward.3} parent=11 // pred_region
        _
      $region16: #{forward.3} parent=11 // pred_fallthru
        _
      // Predicated region
      $region17: #{forward.3} parent=11 // pred_check
        %p165 = pneg %p79
      $region18: #{forward.3} parent=11 // pred_check_branch
        %167 = sbr.rel (%p165) target = $region20
      $region19: #{forward.3} parent=11 // pred_region
        _
      $region20: #{forward.3} parent=11 // pred_fallthru
        _
      // Predicated region
      $region21: #{forward.3} parent=11 // pred_check
        %p168 = pneg %p100
      $region22: #{forward.3} parent=11 // pred_check_branch
        %170 = sbr.rel (%p168) target = $region24
      $region23: #{forward.3} parent=11 // pred_region
        _
      $region24: #{forward.3} parent=11 // pred_fallthru
        _
      // Predicated region
      $region25: #{forward.3} parent=11 // pred_check
        %p171 = pneg %p121
      $region26: #{forward.3} parent=11 // pred_check_branch
        %173 = sbr.rel (%p171) target = $region28
      $region27: #{forward.3} parent=11 // pred_region
        _
      $region28: #{forward.3} parent=11 // pred_fallthru
        _
    $region12: #{forward.3} parent=5 // pred_fallthru
      _
    %p174 = scmp.lt.s32.totalorder %s11, 2
    // Predicated region
    $region29: #{forward.3} parent=5 // pred_check
      %p175 = pneg %p174
    $region30: #{forward.3} parent=5 // pred_check_branch
      %177 = sbr.rel (%p175) target = $region32
    $region31: #{forward.3} parent=5 // pred_region
      // Predicated region
      $region33: #{forward.3} parent=31 // pred_check
        %p178 = pneg %p31
      $region34: #{forward.3} parent=31 // pred_check_branch
        %180 = sbr.rel (%p178) target = $region36
      $region35: #{forward.3} parent=31 // pred_region
        %p181 = scmp.lt.s32.totalorder %s11, 1
        %s182 = scalar_select %p181, %s11, 1
        %s183 = smul.addr %s182, 2
        %s184 = smul.addr %s183, 4
        %s185 = scalar_lea.vmem %s0, %s184
      $region36: #{forward.3} parent=31 // pred_fallthru
        _
    $region32: #{forward.3} parent=5 // pred_fallthru
      _
    %p186 = scmp.le.s32.totalorder 1, %s11
    %p187 = scmp.lt.s32.totalorder %s11, 3
    %p188 = pnand %p186, %p187
    %p189 = pneg %p188
    // Predicated region
    $region37: #{forward.3} parent=5 // pred_check
      _
    $region38: #{forward.3} parent=5 // pred_check_branch
      %191 = sbr.rel (%p188) target = $region40
    $region39: #{forward.3} parent=5 // pred_region
      %s192 = ssub.s32 %s11, 1
      %p193 = scmp.lt.s32.totalorder %s16, 1
      %s194 = scalar_select %p193, %s16, 1
      %s195 = smul.addr %s194, 2
      %s196 = smul.addr %s195, 4
      %s197 = scalar_lea.vmem %s0, %s196
      %p198 = pneg %p37
      %p199 = pneg %p34
      %p200 = pneg %p58
      %p201 = pneg %p55
      %p202 = pneg %p79
      %p203 = pneg %p76
      %p204 = pneg %p100
      %p205 = pneg %p97
      %p206 = pneg %p121
      %p207 = pneg %p118
      %p208 = pneg %p147
      %p209 = pneg %p144
      %p210 = scmp.lt.s32.totalorder %s16, 1
      %s211 = scalar_select %p210, %s16, 1
      %s212 = smul.addr %s211, 2
      %s213 = smul.addr %s212, 8
      %s214 = scalar_lea.vmem %s5, %s213
      %p215 = scmp.lt.s32.totalorder %s16, 1
      %s216 = scalar_select %p215, %s16, 1
      %s217 = smul.addr %s216, 2
      %s218 = smul.addr %s217, 4
      %s219 = scalar_lea.vmem %s0, %s218
      %p220 = scmp.lt.s32.totalorder %s16, 1
      %s221 = scalar_select %p220, %s16, 1
      %s222 = smul.addr %s221, 2
      %s223 = smul.addr %s222, 8
      %s224 = scalar_lea.vmem %s5, %s223
      %v226 = vld [vmem:[%s219] sm:$0xff]
      %v227 = vld [vmem:[%s1] sm:$0xf]
      %229 = vset.pattern.permute.xlu0 0
      %230 = vperm.xlu0 %229, %v227
      %v231 = vpop.permute.xlu0 %230
      %v233 = vunpack.c.l.s4 839922192
      %v234 = vunpack.c.0.s8 %v233
      %v235 = vlaneseq
      %v236 = vshrl.u32 %v235, 7
      %v237 = vsub.s32 %v234, %v236
      %v238 = vrot.slane %v231, %v237
      %v240 = vmul.f32 %v226, %v238
      %v241 = vld [vmem:[%s2] sm:$0xf]
      %243 = vset.pattern.permute.xlu0 0
      %244 = vperm.xlu0 %243, %v241
      %v245 = vpop.permute.xlu0 %244
      %v247 = vunpack.c.l.s4 839922192
      %v248 = vunpack.c.0.s8 %v247
      %v249 = vlaneseq
      %v250 = vshrl.u32 %v249, 7
      %v251 = vsub.s32 %v248, %v250
      %v252 = vrot.slane %v245, %v251
      %v254 = vadd.f32 %v240, %v252
      %v256 = vcombine.high %v254, %v254
      %v258 = vrot.slane %v254, 4
      %v259 = vrot.slane %v256, 4
      %260 = vrot.lane.b32.xlu0 %v258, 127
      %v261 = vpop.permute.xlu0 %260
      %262 = vrot.lane.b32.xlu0 %v259, 127
      %v263 = vpop.permute.xlu0 %262
      %vm264 = vcmask 1039360
      %v265 = vsel %vm264, %v261, %v263
      %v266 = vsel %vm264, %v263, %v261
      %269 = vrot.lane.b32.xlu0 %v254, 126
      %v270 = vpop.permute.xlu0 %269
      %271 = vrot.lane.b32.xlu0 %v256, 126
      %v272 = vpop.permute.xlu0 %271
      %vm273 = vcmask 1031168
      %v274 = vsel %vm273, %v270, %v272
      %v275 = vsel %vm273, %v272, %v270
      %278 = vrot.lane.b32.xlu0 %v258, 112
      %v279 = vpop.permute.xlu0 %278
      %280 = vrot.lane.b32.xlu0 %v259, 112
      %v281 = vpop.permute.xlu0 %280
      %vm282 = vcmask 916480
      %v283 = vsel %vm282, %v279, %v281
      %v284 = vsel %vm282, %v281, %v279
      %287 = vrot.lane.b32.xlu0 %v254, 111
      %v288 = vpop.permute.xlu0 %287
      %289 = vrot.lane.b32.xlu0 %v256, 111
      %v290 = vpop.permute.xlu0 %289
      %vm291 = vcmask 908288
      %v292 = vsel %vm291, %v288, %v290
      %v293 = vsel %vm291, %v290, %v288
      %296 = vrot.lane.b32.xlu0 %v258, 110
      %v297 = vpop.permute.xlu0 %296
      %298 = vrot.lane.b32.xlu0 %v259, 110
      %v299 = vpop.permute.xlu0 %298
      %vm300 = vcmask 900096
      %v301 = vsel %vm300, %v297, %v299
      %v302 = vsel %vm300, %v299, %v297
      %305 = vrot.lane.b32.xlu0 %v254, 96
      %v306 = vpop.permute.xlu0 %305
      %307 = vrot.lane.b32.xlu0 %v256, 96
      %v308 = vpop.permute.xlu0 %307
      %vm309 = vcmask 785408
      %v310 = vsel %vm309, %v306, %v308
      %v311 = vsel %vm309, %v308, %v306
      %314 = vrot.lane.b32.xlu0 %v258, 95
      %v315 = vpop.permute.xlu0 %314
      %316 = vrot.lane.b32.xlu0 %v259, 95
      %v317 = vpop.permute.xlu0 %316
      %vm318 = vcmask 777216
      %v319 = vsel %vm318, %v315, %v317
      %v320 = vsel %vm318, %v317, %v315
      %323 = vrot.lane.b32.xlu0 %v254, 94
      %v324 = vpop.permute.xlu0 %323
      %325 = vrot.lane.b32.xlu0 %v256, 94
      %v326 = vpop.permute.xlu0 %325
      %vm327 = vcmask 769024
      %v328 = vsel %vm327, %v324, %v326
      %v329 = vsel %vm327, %v326, %v324
      %vm332 = vcmask 1043456
      %v333 = vsel %vm332, %v254, %v265
      %v334 = vsel %vm332, %v256, %v266
      %v335 = vsel %vm332, %v274, %v283
      %v336 = vsel %vm332, %v275, %v284
      %v337 = vsel %vm332, %v292, %v301
      %v338 = vsel %vm332, %v293, %v302
      %v339 = vsel %vm332, %v310, %v319
      %v340 = vsel %vm332, %v311, %v320
      %v341 = vpack.c.bf16 %v335, %v333
      %v342 = vpack.c.bf16 %v336, %v334
      %v343 = vpack.c.bf16 %v339, %v337
      %v344 = vpack.c.bf16 %v340, %v338
      %v345 = vpack.c.bf16 %v328, %v328
      %v346 = vpack.c.bf16 %v329, %v329
      %v347 = vld [vmem:[%s3] sm:$0xf]
      %v348 = vld [vmem:[%s4] sm:$0xff]
      %350 = vset.pattern.permute.xlu0 0
      %351 = vperm.xlu0 %350, %v348
      %v352 = vpop.permute.xlu0 %351
      %vm354 = vcmask 293888
      %v356 = vsel %vm354, %v347, 0
      %vm358 = vcmask 1041408
      %v360 = vsel %vm358, %v345, 0
      %v363 = vsel %vm358, %v346, 0
      %365 = vmatprep.subr.bf16.mxu0 %v342
      %366 = vmatpush1.bf16.msra.mxu0 %v341
      %367 = vmatprep.subr.bf16.mxu0 %v344
      %368 = vmatpush1.bf16.msra.mxu0 %v343
      %369 = vmatprep.subr.bf16.mxu0 %v363
      %370 = vmatpush1.bf16.msra.mxu0 %v360
      %371 = vmatprep.subr.bf16.mxu0 0
      %372 = vmatpush1.bf16.msra.mxu0 0
      %373 = vmatprep.subr.bf16.mxu0 0
      %374 = vmatpush1.bf16.msra.mxu0 0
      %375 = vmatprep.subr.bf16.mxu0 0
      %376 = vmatpush1.bf16.msra.mxu0 0
      %377 = vmatprep.subr.bf16.mxu0 0
      %378 = vmatpush1.bf16.msra.mxu0 0
      %379 = vmatprep.subr.bf16.mxu0 0
      %380 = vmatpush1.bf16.msra.mxu0 0
      %381 = vmatprep.subr.bf16.mxu0 0
      %382 = vmatpush1.bf16.msra.mxu0 0
      %383 = vmatprep.subr.bf16.mxu0 0
      %384 = vmatpush1.bf16.msra.mxu0 0
      %385 = vmatprep.subr.bf16.mxu0 0
      %386 = vmatpush1.bf16.msra.mxu0 0
      %387 = vmatprep.subr.bf16.mxu0 0
      %388 = vmatpush1.bf16.msra.mxu0 0
      %389 = vmatprep.subr.bf16.mxu0 0
      %390 = vmatpush1.bf16.msra.mxu0 0
      %391 = vmatprep.subr.bf16.mxu0 0
      %392 = vmatpush1.bf16.msra.mxu0 0
      %393 = vmatprep.subr.bf16.mxu0 0
      %394 = vmatpush1.bf16.msra.mxu0 0
      %395 = vmatprep.subr.bf16.mxu0 0
      %396 = vmatpush1.bf16.msra.mxu0 0
      %397 = vmatprep.mubr.bf16.mxu0 0
      %398 = vmatmul.mubr.bf16.gmra.mrb[0].mxu0 %v356
      %v399 = vpop.f32.mrb[0].mxu0
      %v400 = vadd.f32 %v352, %v399
      %v401 = vpop.f32.mrb[0].mxu0
      %v402 = vadd.f32 %v352, %v401
      %v403 = vpop.f32.mrb[0].mxu0
      %v404 = vpop.f32.mrb[0].mxu0
      %405 = vdwg.mxu0
      %406 = vst [vmem:[%s224] sm:$0xff] %v400
      %407 = vst [vmem:[%s224 + $0x8] sm:$0xff] %v402
      %p408 = scmp.lt.s32.totalorder %s16, 1
      %s409 = scalar_select %p408, %s16, 1
      %s410 = smul.addr %s409, 2
      %s411 = smul.addr %s410, 8
      %s412 = scalar_lea.vmem %s5, %s411
      // Predicated region
      $region41: #{forward.3} parent=39 // pred_check
        %p413 = pneg %p144
      $region42: #{forward.3} parent=39 // pred_check_branch
        %415 = sbr.rel (%p413) target = $region44
      $region43: #{forward.3} parent=39 // pred_region
        _
      $region44: #{forward.3} parent=39 // pred_fallthru
        _
    $region40: #{forward.3} parent=5 // pred_fallthru
      _
    %p416 = scmp.le.s32.totalorder 2, %s11
    // Predicated region
    $region45: #{forward.3} parent=5 // pred_check
      %p417 = pneg %p416
    $region46: #{forward.3} parent=5 // pred_check_branch
      %419 = sbr.rel (%p417) target = $region48
    $region47: #{forward.3} parent=5 // pred_region
      %s420 = ssub.s32 %s11, 2
      // Predicated region
      $region49: #{forward.3} parent=47 // pred_check
        %p421 = pneg %p150
      $region50: #{forward.3} parent=47 // pred_check_branch
        %423 = sbr.rel (%p421) target = $region52
      $region51: #{forward.3} parent=47 // pred_region
        %p424 = scmp.lt.s32.totalorder %s17, 1
        %s425 = scalar_select %p424, %s17, 1
        %s426 = smul.addr %s425, 2
        %s427 = smul.addr %s426, 8
        %s428 = scalar_lea.vmem %s5, %s427
      $region52: #{forward.3} parent=47 // pred_fallthru
        _
    $region48: #{forward.3} parent=5 // pred_fallthru
      _
  $region6: #{forward.3} parent=0 // loop_footer
    %s15 = sadd.s32 1, %s11
  $region7: #{forward.3} parent=0 // loop_footer_branch
    %10 = sbr.rel target = $region3
  $region8: #{forward.3} parent=0 // loop_exit
    _

</llo_original>
